<compile_context>
chip_gen: v6e
topology: v6e:2x2x1
jax: 0.10.0
libtpu: 0.0.40
codegen_flags: <defaults>
</compile_context>

<pallas_src>
import jax
import jax.numpy as jnp
from jax.experimental import pallas as pl
from jax.experimental.pallas import tpu as pltpu


def _round_up(x, m):
    return ((x + m - 1) // m) * m


def _linear_kernel(x_ref, wt_ref, o_ref):
    # (TB, K) @ (K, N) on the MXU, f32 accumulation, minimal epilogue.
    o_ref[...] = jnp.dot(
        x_ref[...], wt_ref[...], preferred_element_type=jnp.float32
    ).astype(o_ref.dtype)


def prepare_classifier_weight(weight, compute_dtype=jnp.bfloat16):
    """One-time prep: nn.Linear weight (class_number, input_dim) -> (input_dim, class_number)."""
    if compute_dtype is not None:
        weight = weight.astype(compute_dtype)
    return weight.T


def preference_classifier_forward(x, weight_t, *, block_batch=2048,
                                  compute_dtype=jnp.bfloat16):
    """x: (batch, input_dim), weight_t: (input_dim, class_number) -> f32 (batch, class_number)."""
    batch, input_dim = x.shape
    wk, class_number = weight_t.shape
    assert wk == input_dim, "weight_t must be (input_dim, class_number)"

    if compute_dtype is not None and x.dtype != compute_dtype:
        x = x.astype(compute_dtype)
    if weight_t.dtype != x.dtype:
        weight_t = weight_t.astype(x.dtype)

    out_dtype = jnp.float32
    in_bytes = jnp.dtype(x.dtype).itemsize
    out_bytes = jnp.dtype(out_dtype).itemsize

    # Batch tile: multiple of 8 sublanes; at least 2 grid tiles when batch > 8 so the
    # "parallel" axis can shard across v7x's two TensorCores.
    if batch <= 8:
        tb = batch  # block == full array dim -> always legal, single grid step
    else:
        tb = min(_round_up(block_batch, 8), _round_up(batch, 8))
        tb = min(tb, _round_up(pl.cdiv(batch, 2), 8))

    # Conservative VMEM footprint (Mosaic pads lanes to 128 / sublanes to 8 internally;
    # x and out tiles are double-buffered; the resident weight is counted double too).
    def vmem_estimate(t):
        k_lanes = _round_up(input_dim, 128)
        n_lanes = _round_up(class_number, 128)
        x_b = 2 * _round_up(t, 8) * k_lanes * in_bytes
        w_b = 2 * _round_up(input_dim, 8) * n_lanes * in_bytes
        o_b = 2 * _round_up(t, 8) * n_lanes * out_bytes
        return x_b + w_b + o_b

    vmem_budget = 12 * 1024 * 1024  # fits v5e's 16 MiB scoped-VMEM default with headroom
    while tb > 8 and vmem_estimate(tb) > vmem_budget:
        tb = max(8, _round_up(tb // 2, 8))

    grid = (pl.cdiv(batch, tb),)
    return pl.pallas_call(
        _linear_kernel,
        out_shape=jax.ShapeDtypeStruct((batch, class_number), out_dtype),
        grid=grid,
        in_specs=[
            # batch tile of x; K is the full dim (no HBM pad copy needed)
            pl.BlockSpec((tb, input_dim), lambda i: (i, 0)),
            # weight stays VMEM-resident (constant index_map)
            pl.BlockSpec((input_dim, class_number), lambda i: (0, 0)),
        ],
        # narrow (tb, class_number) output block == full last dim -> minimal writeback
        out_specs=pl.BlockSpec((tb, class_number), lambda i: (i, 0)),
        compiler_params=pltpu.CompilerParams(
            dimension_semantics=("parallel",),
        ),
    )(x, weight_t)


if __name__ == "__main__":
    # Shapes consistent with the module: the classifier consumes the concatenation of the
    # three extractor features (lay/lex/syn hidden dims), here 32+32+32 = 96; 8 classes.
    batch, class_number = 4, 8
    lay_hidden, lex_hidden, syn_hidden = 32, 32, 32
    input_dim = lay_hidden + lex_hidden + syn_hidden  # 96

    key = jax.random.PRNGKey(0)
    kx, kw, kx2 = jax.random.split(key, 3)
    # Deterministic stand-in for the (eval-mode, dropout=identity) style vector.
    x = jax.random.normal(kx, (batch, input_dim), dtype=jnp.float32)
    # nn.Linear(input_dim, class_number, bias=False) weight: (class_number, input_dim).
    weight = jax.random.normal(kw, (class_number, input_dim), dtype=jnp.float32) * 0.1

    ref = x @ weight.T  # torch.nn.Linear(bias=False) semantics

    # Default (bf16 operands, f32 accumulation) path; weight prepped once, wrapper jitted.
    w_t = prepare_classifier_weight(weight)
    fwd = jax.jit(preference_classifier_forward)
    out = fwd(x, w_t)
    jax.block_until_ready(out)
    assert out.shape == (batch, class_number)
    assert out.dtype == jnp.float32
    assert jnp.allclose(out, ref, atol=3e-2, rtol=3e-2)

    # Exact f32 path.
    w_t_f32 = prepare_classifier_weight(weight, compute_dtype=None)
    out_f32 = preference_classifier_forward(x, w_t_f32, compute_dtype=None)
    jax.block_until_ready(out_f32)
    assert jnp.allclose(out_f32, ref, atol=1e-5, rtol=1e-5)

    # Multi-tile batch path (2 grid steps; exercises the v7x 2-TC split of the batch axis).
    batch2 = 16
    x2 = jax.random.normal(kx2, (batch2, input_dim), dtype=jnp.float32)
    out2 = preference_classifier_forward(x2, w_t_f32, block_batch=8, compute_dtype=None)
    jax.block_until_ready(out2)
    assert out2.shape == (batch2, class_number)
    assert jnp.allclose(out2, x2 @ weight.T, atol=1e-5, rtol=1e-5)

    print("KERNEL_OK")
</pallas_src>

<mosaic_0001>
module attributes {stable_mosaic.version = 11 : i64} {
  func.func @_linear_kernel(%arg0: i32, %arg1: memref<4x96xbf16, #tpu.memory_space<vmem>>, %arg2: memref<96x8xbf16, #tpu.memory_space<vmem>>, %arg3: memref<4x8xf32, #tpu.memory_space<vmem>>) attributes {dimension_semantics = [#tpu.dimension_semantics<parallel>], iteration_bounds = array<i64: 1>, scalar_prefetch = 0 : i64, scratch_operands = 0 : i64, tpu.core_type = #tpu.core_type<tc>, window_params = [{transform_indices = @transform_0, window_bounds = array<i64: 4, 96>}, {pipeline_mode = #tpu.pipeline_mode<synchronous>, transform_indices = @transform_1, window_bounds = array<i64: 96, 8>}, {transform_indices = @transform_2, window_bounds = array<i64: 4, 8>}]} {
    %c0 = arith.constant 0 : index
    %c0_0 = arith.constant 0 : index
    %0 = vector.load %arg1[%c0, %c0_0] : memref<4x96xbf16, #tpu.memory_space<vmem>>, vector<4x96xbf16>
    %c0_1 = arith.constant 0 : index
    %c0_2 = arith.constant 0 : index
    %1 = vector.load %arg2[%c0_1, %c0_2] : memref<96x8xbf16, #tpu.memory_space<vmem>>, vector<96x8xbf16>
    %cst = arith.constant dense<0.000000e+00> : vector<4x8xf32>
    %2 = tpu.matmul %0, %1, %cst {dimension_numbers = #tpu.dot_dimension_numbers<[1], [0], [0], [1], [0, 0, 1, 1], [], []>} : vector<4x96xbf16>, vector<96x8xbf16>, vector<4x8xf32> -> vector<4x8xf32>
    %c0_3 = arith.constant 0 : index
    %c0_4 = arith.constant 0 : index
    %3 = vector.load %arg3[%c0_3, %c0_4] : memref<4x8xf32, #tpu.memory_space<vmem>>, vector<4x8xf32>
    tpu.vector_store %arg3[%c0_3, %c0_4], %2 {strides = array<i32>} : memref<4x8xf32, #tpu.memory_space<vmem>>, vector<4x8xf32>,
    return
  }
  func.func @transform_0(%arg0: i32) -> (i32, i32) {
    %c0_i32 = arith.constant 0 : i32
    %c0_i32_0 = arith.constant 0 : i32
    return %arg0, %c0_i32 : i32, i32
  }
  func.func @transform_1(%arg0: i32) -> (i32, i32) {
    %c0_i32 = arith.constant 0 : i32
    %c0_i32_0 = arith.constant 0 : i32
    %c0_i32_1 = arith.constant 0 : i32
    return %c0_i32, %c0_i32_0 : i32, i32
  }
  func.func @transform_2(%arg0: i32) -> (i32, i32) {
    %c0_i32 = arith.constant 0 : i32
    %c0_i32_0 = arith.constant 0 : i32
    return %arg0, %c0_i32 : i32, i32
  }
}

</mosaic_0001>

<llo_original>
// kernel: preference_classifier_forward.1
$region0: #{preference_classifier_forward.1}
  #allocation0 [shape = 'u32[]', space=smem, size = 0x4, offset = 0x4, fixed_abs, tag = 'smem constant byte address 0x4 - core index']
  #allocation1 [shape = 'u32[144,128]{1,0:T(1,128)}', space=vmem, size = 0x12000, scoped, tag = 'internal scratch']
  %s0 = inlined_call_operand.vmem [shape: bf16[4,96], index: 0, kind: input, shape index: {}]
  %s1 = inlined_call_operand.vmem [shape: bf16[96,8], index: 1, kind: input, shape index: {}]
  %s2 = inlined_call_operand.hbm [shape: f32[4,8], index: 2, kind: output, shape index: {}]
  %s3 = sld [smem:[#allocation0]]
  $region18: #{preference_classifier_forward.1} parent=0
    _
  %s5 = ssub.s32 1, %s3
  %s6 = scalar_select 0, %s5, %s3
  $region1: #{preference_classifier_forward.1} parent=0
    #allocation2 [shape = 'u8[2048]{0}', space=vmem, size = 0x800, scoped, tag = 'output window, operand 0, single buffered']
    #allocation3 [shape = 's32[1]{0}', space=sflag, size = 0x4, scoped, tag = 'scoped memory for preference_classifier_forward.1']
    %7 = vsyncpa [#allocation3], 0
    // Predicated region
    $region2: #{preference_classifier_forward.1} parent=1 // pred_check
      _
    $region3: #{preference_classifier_forward.1} parent=1 // pred_check_branch
      %9 = sbr.rel (0) target = $region5
    $region4: #{preference_classifier_forward.1} parent=1 // pred_region
      _
    $region5: #{preference_classifier_forward.1} parent=1 // pred_fallthru
      _
    // Predicated region
    $region6: #{preference_classifier_forward.1} parent=1 // pred_check
      _
    $region7: #{preference_classifier_forward.1} parent=1 // pred_check_branch
      %11 = sbr.rel (0) target = $region9
    $region8: #{preference_classifier_forward.1} parent=1 // pred_region
      _
    $region9: #{preference_classifier_forward.1} parent=1 // pred_fallthru
      _
    %v13 = vld [vmem:[%s0] sm:$0x3]
    %v14 = vld [vmem:[%s1] sm:$0xf]
    %v15 = vld [vmem:[%s1 + $0x4] sm:$0xf]
    %v16 = vld [vmem:[%s1 + $0x8] sm:$0xf]
    %v17 = vld [vmem:[%s1 + $0xc] sm:$0xf]
    %v18 = vld [vmem:[%s1 + $0x10] sm:$0xf]
    %v19 = vld [vmem:[%s1 + $0x14] sm:$0xf]
    %v20 = vld [vmem:[%s1 + $0x18] sm:$0xf]
    %v21 = vld [vmem:[%s1 + $0x1c] sm:$0xf]
    %v22 = vld [vmem:[%s1 + $0x20] sm:$0xf]
    %v23 = vld [vmem:[%s1 + $0x24] sm:$0xf]
    %v24 = vld [vmem:[%s1 + $0x28] sm:$0xf]
    %v25 = vld [vmem:[%s1 + $0x2c] sm:$0xf]
    %v38 = vunpack.c.l.b16 %v14
    %v39 = vunpack.c.l.b16 %v15
    %v40 = vunpack.c.l.b16 %v16
    %v41 = vunpack.c.l.b16 %v17
    %v42 = vunpack.c.l.b16 %v18
    %v43 = vunpack.c.l.b16 %v19
    %v44 = vunpack.c.l.b16 %v20
    %v45 = vunpack.c.l.b16 %v21
    %v46 = vunpack.c.l.b16 %v22
    %v47 = vunpack.c.l.b16 %v23
    %v48 = vunpack.c.l.b16 %v24
    %v49 = vunpack.c.l.b16 %v25
    %v50 = vpack.c.b16 %v39, %v38
    %v51 = vpack.c.b16 %v41, %v40
    %v52 = vpack.c.b16 %v43, %v42
    %v53 = vpack.c.b16 %v45, %v44
    %v54 = vpack.c.b16 %v47, %v46
    %v55 = vpack.c.b16 %v49, %v48
    %vm62 = vcmask 785408
    %v64 = vsel %vm62, %v13, 0
    %66 = vmatprep.subr.bf16.mxu0 0
    %67 = vmatpush1.bf16.msra.mxu0 0
    %68 = vmatprep.subr.bf16.mxu0 0
    %69 = vmatpush1.bf16.msra.mxu0 0
    %70 = vmatprep.subr.bf16.mxu0 0
    %71 = vmatpush1.bf16.msra.mxu0 %v55
    %72 = vmatprep.subr.bf16.mxu0 0
    %73 = vmatpush1.bf16.msra.mxu0 %v54
    %74 = vmatprep.subr.bf16.mxu0 0
    %75 = vmatpush1.bf16.msra.mxu0 %v53
    %76 = vmatprep.subr.bf16.mxu0 0
    %77 = vmatpush1.bf16.msra.mxu0 %v52
    %78 = vmatprep.subr.bf16.mxu0 0
    %79 = vmatpush1.bf16.msra.mxu0 %v51
    %80 = vmatprep.subr.bf16.mxu0 0
    %81 = vmatpush1.bf16.msra.mxu0 %v50
    %82 = vmatprep.subr.bf16.mxu0 0
    %83 = vmatpush2.bf16.msra.mxu0 0
    %84 = vmatprep.subr.bf16.mxu0 0
    %85 = vmatpush2.bf16.msra.mxu0 0
    %86 = vmatprep.subr.bf16.mxu0 0
    %87 = vmatpush2.bf16.msra.mxu0 0
    %88 = vmatprep.subr.bf16.mxu0 0
    %89 = vmatpush2.bf16.msra.mxu0 0
    %90 = vmatprep.subr.bf16.mxu0 0
    %91 = vmatpush2.bf16.msra.mxu0 0
    %92 = vmatprep.subr.bf16.mxu0 0
    %93 = vmatpush2.bf16.msra.mxu0 0
    %94 = vmatprep.subr.bf16.mxu0 0
    %95 = vmatpush2.bf16.msra.mxu0 0
    %96 = vmatprep.subr.bf16.mxu0 0
    %97 = vmatpush2.bf16.msra.mxu0 0
    %98 = vmatprep.mubr.bf16.mxu0 0
    %99 = vmatmul.mubr.bf16.gmra.mxu0 %v64
    %v100 = vpop.f32.mrf.mxu0
    %v101 = vadd.f32 0.0, %v100
    %v102 = vpop.f32.mrf.mxu0
    %v103 = vpop.f32.mrf.mxu0
    %v104 = vpop.f32.mrf.mxu0
    %105 = vdwg.mxu0
    %vm106 = vcmask 60416
    %107 = vst.msk [vmem:[#allocation2] sm:$0xf] %vm106, %v101
    // Predicated region
    $region10: #{preference_classifier_forward.1} parent=1 // pred_check
      _
    $region11: #{preference_classifier_forward.1} parent=1 // pred_check_branch
      %109 = sbr.rel (0) target = $region13
    $region12: #{preference_classifier_forward.1} parent=1 // pred_region
      %s111 = ssub.s32 64, 64
      %112 = vsyncadd [#allocation3], %s111
      %s114 = sshll.u32 [#allocation2], 4
      %s115 = int_to_ptr.vmem [resolvable:$true] %s114
      %117 = dma.vmem_to_hbm [thread:$0]  %s115, 64, %s2, [#allocation3]
    $region13: #{preference_classifier_forward.1} parent=1 // pred_fallthru
      _
    // Predicated region
    $region14: #{preference_classifier_forward.1} parent=1 // pred_check
      _
    $region15: #{preference_classifier_forward.1} parent=1 // pred_check_branch
      %119 = sbr.rel (0) target = $region17
    $region16: #{preference_classifier_forward.1} parent=1 // pred_region
      %120 = dma.done [#allocation3], 64
    $region17: #{preference_classifier_forward.1} parent=1 // pred_fallthru
      _
    %121 = vsyncpa [#allocation3], 1

</llo_original>
